<compile_context>
chip_gen: v7x
topology: tpu7x:2x2x1
jax: 0.10.0
libtpu: 0.0.40
codegen_flags: <defaults>
</compile_context>

<pallas_src>
import jax
import jax.numpy as jnp
from jax.experimental import pallas as pl
from jax.experimental.pallas import tpu as pltpu

LANE = 128       # TPU lane width
VMEM_BUDGET = 48 << 20   # headroom below v7x's 64 MiB physical VMEM


def _round_up(n, m):
    return ((n + m - 1) // m) * m


# ----------------------------------------------------------------------------
# Kernel: one batch tile -> hidden -> fused (policy|value) slab
# ----------------------------------------------------------------------------
def actor_critic_kernel(x_ref, wfc_ref, bfc_ref, wh_ref, bh_ref, out_ref):
    # hidden = relu(x @ W_fc + b_fc)                      -> (TB, 256)
    h = jnp.dot(x_ref[...], wfc_ref[...], preferred_element_type=jnp.float32)
    h = jnp.maximum(h + bfc_ref[...], 0.0)

    # fused heads: policy in cols [0, A), value in col A, zero-padded to 128
    # lanes.  Single MXU matmul + lane-dense unmasked store.
    out_ref[...] = (
        jnp.dot(h, wh_ref[...], preferred_element_type=jnp.float32) + bh_ref[...]
    ).astype(out_ref.dtype)


# ----------------------------------------------------------------------------
# One-time parameter preparation (head fusion + layout).  Call once per weight
# update / model load, NOT per forward step.
# ----------------------------------------------------------------------------
def prepare_params(params):
    hidden = params["w_fc"].shape[1]
    A = params["w_policy"].shape[1]
    n_pad = _round_up(A + 1, LANE)

    w_heads = (
        jnp.zeros((hidden, n_pad), jnp.float32)
        .at[:, :A].set(params["w_policy"].astype(jnp.float32))
        .at[:, A].set(params["w_value"].astype(jnp.float32)[:, 0])
    )
    b_heads = (
        jnp.zeros((1, n_pad), jnp.float32)
        .at[:, :A].set(params["b_policy"].reshape(1, A).astype(jnp.float32))
        .at[:, A].set(params["b_value"].reshape(()).astype(jnp.float32))
    )
    return {
        "w_fc": params["w_fc"].astype(jnp.float32),                  # (K, hidden)
        "b_fc": params["b_fc"].reshape(1, hidden).astype(jnp.float32),
        "w_heads": w_heads,                                          # (hidden, 128)
        "b_heads": b_heads,                                          # (1, 128)
    }


# ----------------------------------------------------------------------------
# Batch-tile choice: biggest tile that fits VMEM, >=2 grid steps for v7x
# megacore once B > 128, capped at 512 rows (past ~512 the per-step overhead
# is already amortized and bigger tiles just burn VMEM).
# ----------------------------------------------------------------------------
def _choose_tb(B, input_dim, hidden, n_pad):
    if B <= 128:
        return _round_up(max(B, 1), 8)          # single step, small batch
    tb = min(512, _round_up((B + 1) // 2, 8))   # >=2 steps, <=512 rows
    resident = 4 * (input_dim * hidden + hidden * n_pad + 2 * hidden + 2 * n_pad)
    # double-buffered x/out tiles + hidden intermediate + resident weights
    while tb > 8 and 4 * tb * (2 * input_dim + 2 * n_pad + hidden) + resident > VMEM_BUDGET:
        tb = max(8, _round_up(tb // 2, 8) if tb // 2 >= 8 else 8)
        if tb == 8:
            break
    return tb


# ----------------------------------------------------------------------------
# Forward pass.  `prep` comes from prepare_params(); action_space is static.
# ----------------------------------------------------------------------------
def actor_critic_forward(x, prep, *, action_space):
    B, input_dim = x.shape
    hidden = prep["w_fc"].shape[1]
    n_pad = prep["w_heads"].shape[1]

    TB = _choose_tb(B, input_dim, hidden, n_pad)
    B_pad = _round_up(B, TB)

    x = x.astype(jnp.float32)
    if B_pad != B:
        # batch-only padding; K stays at the full (unpadded) input_dim because
        # the contraction block is full-extent (exempt from the 128-lane rule).
        x = jnp.pad(x, ((0, B_pad - B), (0, 0)))

    grid = (B_pad // TB,)

    # VMEM plan (bytes): double-buffered x/out tiles, single-buffered weights.
    vmem_needed = 4 * (
        2 * TB * input_dim        # x tiles (2 buffers)
        + 2 * TB * n_pad          # out tiles (2 buffers)
        + TB * hidden             # hidden intermediate
        + input_dim * hidden      # w_fc (Buffered(1))
        + hidden * n_pad          # w_heads (Buffered(1))
        + 2 * hidden + 2 * n_pad  # biases
    )
    vmem_limit = int(min(max(2 * vmem_needed, 32 << 20), 64 << 20))
    # NOTE: for very large input_dim (K*256*4B approaching VMEM) a K grid axis
    # with a VMEM accumulator would be needed; RL observation dims don't hit it.

    flops = 2 * B_pad * (input_dim * hidden + hidden * n_pad)
    bytes_accessed = 4 * (
        B_pad * input_dim + input_dim * hidden + hidden
        + hidden * n_pad + n_pad + B_pad * n_pad
    )

    out = pl.pallas_call(
        actor_critic_kernel,
        out_shape=jax.ShapeDtypeStruct((B_pad, n_pad), jnp.float32),
        grid=grid,
        in_specs=[
            # x tile: streamed / double-buffered along the batch grid
            pl.BlockSpec((TB, input_dim), lambda i: (i, 0)),
            # weights & biases: constant index_map -> DMA'd once, VMEM-resident,
            # single-buffered (never re-fetched) to halve their footprint.
            pl.BlockSpec((input_dim, hidden), lambda i: (0, 0),
                         pipeline_mode=pl.Buffered(1)),
            pl.BlockSpec((1, hidden), lambda i: (0, 0),
                         pipeline_mode=pl.Buffered(1)),
            pl.BlockSpec((hidden, n_pad), lambda i: (0, 0),
                         pipeline_mode=pl.Buffered(1)),
            pl.BlockSpec((1, n_pad), lambda i: (0, 0),
                         pipeline_mode=pl.Buffered(1)),
        ],
        out_specs=pl.BlockSpec((TB, n_pad), lambda i: (i, 0)),
        compiler_params=pltpu.CompilerParams(
            # batch axis is independent -> megacore split on v7x, no-op on v5e/v6e
            dimension_semantics=("parallel",),
            vmem_limit_bytes=vmem_limit,
        ),
        cost_estimate=pl.CostEstimate(
            flops=flops, transcendentals=0, bytes_accessed=bytes_accessed),
    )(x, prep["w_fc"], prep["b_fc"], prep["w_heads"], prep["b_heads"])

    # Split the lane-dense slab into the module's two outputs.  (For best
    # throughput, downstream RL-loss code can consume `out` directly instead.)
    policy = out[:B, :action_space]
    value = out[:B, action_space:action_space + 1]
    return policy, value


# ----------------------------------------------------------------------------
# Deterministic init mimicking nn.Linear's U(-1/sqrt(fan_in), 1/sqrt(fan_in)).
# Weights stored transposed: (in_features, out_features).
# ----------------------------------------------------------------------------
def init_params(key, input_dim, action_space, hidden=256):
    k = jax.random.split(key, 6)

    def uni(kk, shape, fan_in):
        bound = 1.0 / jnp.sqrt(jnp.float32(fan_in))
        return jax.random.uniform(kk, shape, jnp.float32, -bound, bound)

    return {
        "w_fc":     uni(k[0], (input_dim, hidden), input_dim),
        "b_fc":     uni(k[1], (1, hidden),         input_dim),
        "w_policy": uni(k[2], (hidden, action_space), hidden),
        "b_policy": uni(k[3], (1, action_space),      hidden),
        "w_value":  uni(k[4], (hidden, 1), hidden),
        "b_value":  uni(k[5], (1, 1),      hidden),
    }


if __name__ == "__main__":
    # Small shapes consistent with the module's forward: x is (batch, input_dim)
    batch, input_dim, action_space = 8, 32, 8

    key = jax.random.PRNGKey(0)
    kx, kp = jax.random.split(key)
    x = jax.random.normal(kx, (batch, input_dim), jnp.float32)
    raw = init_params(kp, input_dim, action_space)

    prep = prepare_params(raw)   # one-time weight fusion/padding (not per step)

    fwd = jax.jit(actor_critic_forward, static_argnames=("action_space",))
    policy, value = jax.block_until_ready(fwd(x, prep, action_space=action_space))

    # Pure-JAX reference check of the same math (unfused heads).
    h_ref = jnp.maximum(x @ raw["w_fc"] + raw["b_fc"], 0.0)
    policy_ref = h_ref @ raw["w_policy"] + raw["b_policy"]
    value_ref = h_ref @ raw["w_value"] + raw["b_value"]
    assert policy.shape == (batch, action_space)
    assert value.shape == (batch, 1)
    assert jnp.allclose(policy, policy_ref, atol=1e-5, rtol=1e-5)
    assert jnp.allclose(value, value_ref, atol=1e-5, rtol=1e-5)

    print("KERNEL_OK")
</pallas_src>

<mosaic_0001>
module attributes {stable_mosaic.version = 11 : i64} {
  func.func @actor_critic_kernel(%arg0: i32, %arg1: memref<8x32xf32, #tpu.memory_space<vmem>>, %arg2: memref<32x256xf32, #tpu.memory_space<vmem>>, %arg3: memref<1x256xf32, #tpu.memory_space<vmem>>, %arg4: memref<256x128xf32, #tpu.memory_space<vmem>>, %arg5: memref<1x128xf32, #tpu.memory_space<vmem>>, %arg6: memref<8x128xf32, #tpu.memory_space<vmem>>) attributes {dimension_semantics = [#tpu.dimension_semantics<parallel>], iteration_bounds = array<i64: 1>, scalar_prefetch = 0 : i64, scratch_operands = 0 : i64, tpu.core_type = #tpu.core_type<tc>, window_params = [{transform_indices = @transform_0, window_bounds = array<i64: 8, 32>}, {pipeline_mode = #tpu.pipeline_mode<synchronous>, transform_indices = @transform_1, window_bounds = array<i64: 32, 256>}, {pipeline_mode = #tpu.pipeline_mode<synchronous>, transform_indices = @transform_2, window_bounds = array<i64: 1, 256>}, {pipeline_mode = #tpu.pipeline_mode<synchronous>, transform_indices = @transform_3, window_bounds = array<i64: 256, 128>}, {pipeline_mode = #tpu.pipeline_mode<synchronous>, transform_indices = @transform_4, window_bounds = array<i64: 1, 128>}, {transform_indices = @transform_5, window_bounds = array<i64: 8, 128>}]} {
    %c0 = arith.constant 0 : index
    %c0_0 = arith.constant 0 : index
    %0 = vector.load %arg1[%c0, %c0_0] : memref<8x32xf32, #tpu.memory_space<vmem>>, vector<8x32xf32>
    %c0_1 = arith.constant 0 : index
    %c0_2 = arith.constant 0 : index
    %1 = vector.load %arg2[%c0_1, %c0_2] : memref<32x256xf32, #tpu.memory_space<vmem>>, vector<32x256xf32>
    %cst = arith.constant dense<0.000000e+00> : vector<8x256xf32>
    %2 = tpu.matmul %0, %1, %cst {dimension_numbers = #tpu.dot_dimension_numbers<[1], [0], [0], [1], [0, 0, 1, 1], [], []>} : vector<8x32xf32>, vector<32x256xf32>, vector<8x256xf32> -> vector<8x256xf32>
    %c0_3 = arith.constant 0 : index
    %c0_4 = arith.constant 0 : index
    %3 = vector.load %arg3[%c0_3, %c0_4] : memref<1x256xf32, #tpu.memory_space<vmem>>, vector<1x256xf32>
    %4 = vector.broadcast %3 : vector<1x256xf32> to vector<8x256xf32>
    %5 = arith.addf %2, %4 : vector<8x256xf32>
    %cst_5 = arith.constant 0.000000e+00 : f32
    %6 = vector.broadcast %cst_5 : f32 to vector<8x256xf32>
    %7 = arith.maximumf %5, %6 : vector<8x256xf32>
    %c0_6 = arith.constant 0 : index
    %c0_7 = arith.constant 0 : index
    %8 = vector.load %arg4[%c0_6, %c0_7] : memref<256x128xf32, #tpu.memory_space<vmem>>, vector<256x128xf32>
    %cst_8 = arith.constant dense<0.000000e+00> : vector<8x128xf32>
    %9 = tpu.matmul %7, %8, %cst_8 {dimension_numbers = #tpu.dot_dimension_numbers<[1], [0], [0], [1], [0, 0, 1, 1], [], []>} : vector<8x256xf32>, vector<256x128xf32>, vector<8x128xf32> -> vector<8x128xf32>
    %c0_9 = arith.constant 0 : index
    %c0_10 = arith.constant 0 : index
    %10 = vector.load %arg5[%c0_9, %c0_10] : memref<1x128xf32, #tpu.memory_space<vmem>>, vector<1x128xf32>
    %11 = vector.broadcast %10 : vector<1x128xf32> to vector<8x128xf32>
    %12 = arith.addf %9, %11 : vector<8x128xf32>
    %c0_11 = arith.constant 0 : index
    %c0_12 = arith.constant 0 : index
    %13 = vector.load %arg6[%c0_11, %c0_12] : memref<8x128xf32, #tpu.memory_space<vmem>>, vector<8x128xf32>
    tpu.vector_store %arg6[%c0_11, %c0_12], %12 {strides = array<i32>} : memref<8x128xf32, #tpu.memory_space<vmem>>, vector<8x128xf32>,
    return
  }
  func.func @transform_0(%arg0: i32) -> (i32, i32) {
    %c0_i32 = arith.constant 0 : i32
    %c0_i32_0 = arith.constant 0 : i32
    return %arg0, %c0_i32 : i32, i32
  }
  func.func @transform_1(%arg0: i32) -> (i32, i32) {
    %c0_i32 = arith.constant 0 : i32
    %c0_i32_0 = arith.constant 0 : i32
    %c0_i32_1 = arith.constant 0 : i32
    return %c0_i32, %c0_i32_0 : i32, i32
  }
  func.func @transform_2(%arg0: i32) -> (i32, i32) {
    %c0_i32 = arith.constant 0 : i32
    %c0_i32_0 = arith.constant 0 : i32
    %c0_i32_1 = arith.constant 0 : i32
    return %c0_i32, %c0_i32_0 : i32, i32
  }
  func.func @transform_3(%arg0: i32) -> (i32, i32) {
    %c0_i32 = arith.constant 0 : i32
    %c0_i32_0 = arith.constant 0 : i32
    %c0_i32_1 = arith.constant 0 : i32
    return %c0_i32, %c0_i32_0 : i32, i32
  }
  func.func @transform_4(%arg0: i32) -> (i32, i32) {
    %c0_i32 = arith.constant 0 : i32
    %c0_i32_0 = arith.constant 0 : i32
    %c0_i32_1 = arith.constant 0 : i32
    return %c0_i32, %c0_i32_0 : i32, i32
  }
  func.func @transform_5(%arg0: i32) -> (i32, i32) {
    %c0_i32 = arith.constant 0 : i32
    %c0_i32_0 = arith.constant 0 : i32
    return %arg0, %c0_i32 : i32, i32
  }
}

</mosaic_0001>

<llo_original>
// kernel: actor_critic_forward.1
$region0: #{actor_critic_forward.1}
  #allocation0 [shape = 'u32[]', space=smem, size = 0x4, offset = 0x4, fixed_abs, tag = 'smem constant byte address 0x4 - core index']
  #allocation1 [shape = 'u32[144,128]{1,0:T(1,128)}', space=vmem, size = 0x12000, scoped, tag = 'internal scratch']
  %s0 = inlined_call_operand.hbm [shape: f32[8,32], index: 0, kind: input, shape index: {}]
  %s1 = inlined_call_operand.hbm [shape: f32[32,256], index: 1, kind: input, shape index: {}]
  %s2 = inlined_call_operand.vmem [shape: f32[1,256], index: 2, kind: input, shape index: {}]
  %s3 = inlined_call_operand.hbm [shape: f32[256,128], index: 3, kind: input, shape index: {}]
  %s4 = inlined_call_operand.vmem [shape: f32[1,128], index: 4, kind: input, shape index: {}]
  %s5 = inlined_call_operand.vmem [shape: f32[8,128], index: 5, kind: output, shape index: {}]
  %s6 = sld [smem:[#allocation0]]
  $region42: #{actor_critic_forward.1} parent=0
    _
  %s8 = ssub.s32 1, %s6
  %s9 = scalar_select 0, %s8, %s6
  $region1: #{actor_critic_forward.1} parent=0
    #allocation2 [shape = 'u8[4096]{0}', space=vmem, size = 0x1000, scoped, tag = 'input window, operand 0, single buffered']
    #allocation3 [shape = 's32[1]{0}', space=sflag, size = 0x4, scoped, tag = 'scoped memory for actor_critic_forward.1']
    #allocation4 [shape = 'u8[32768]{0}', space=vmem, size = 0x8000, scoped, tag = 'input window, operand 1, single buffered']
    #allocation5 [shape = 's32[1]{0}', space=sflag, size = 0x4, scoped, tag = 'scoped memory for actor_critic_forward.1']
    #allocation6 [shape = 'u8[131072]{0}', space=vmem, size = 0x20000, scoped, tag = 'input window, operand 3, single buffered']
    %10 = vsyncpa [#allocation3], 0
    %11 = vsyncpa [#allocation5], 0
    // Predicated region
    $region2: #{actor_critic_forward.1} parent=1 // pred_check
      _
    $region3: #{actor_critic_forward.1} parent=1 // pred_check_branch
      %13 = sbr.rel (0) target = $region5
    $region4: #{actor_critic_forward.1} parent=1 // pred_region
      %s15 = ssub.s32 128, 128
      %16 = vsyncadd [#allocation3], %s15
      %s18 = sshll.u32 [#allocation2], 4
      %s19 = int_to_ptr.vmem [resolvable:$true] %s18
      %21 = dma.hbm_to_vmem [thread:$0]  %s0, 128, %s19, [#allocation3]
    $region5: #{actor_critic_forward.1} parent=1 // pred_fallthru
      _
    // Predicated region
    $region6: #{actor_critic_forward.1} parent=1 // pred_check
      _
    $region7: #{actor_critic_forward.1} parent=1 // pred_check_branch
      %23 = sbr.rel (0) target = $region9
    $region8: #{actor_critic_forward.1} parent=1 // pred_region
      %s25 = ssub.s32 1024, 1024
      %26 = vsyncadd [#allocation5], %s25
      %s27 = sshll.u32 [#allocation4], 4
      %s28 = int_to_ptr.vmem [resolvable:$true] %s27
      %33 = dma.hbm_to_vmem [thread:$0]  %s1, 1024, %s28, [#allocation5], 256, 256, 16
    $region9: #{actor_critic_forward.1} parent=1 // pred_fallthru
      _
    // Predicated region
    $region10: #{actor_critic_forward.1} parent=1 // pred_check
      _
    $region11: #{actor_critic_forward.1} parent=1 // pred_check_branch
      %35 = sbr.rel (0) target = $region13
    $region12: #{actor_critic_forward.1} parent=1 // pred_region
      _
    $region13: #{actor_critic_forward.1} parent=1 // pred_fallthru
      _
    // Predicated region
    $region14: #{actor_critic_forward.1} parent=1 // pred_check
      _
    $region15: #{actor_critic_forward.1} parent=1 // pred_check_branch
      %37 = sbr.rel (0) target = $region17
    $region16: #{actor_critic_forward.1} parent=1 // pred_region
      %s39 = ssub.s32 4096, 4096
      %40 = vsyncadd [#allocation5], %s39
      %s41 = sshll.u32 [#allocation6], 4
      %s42 = int_to_ptr.vmem [resolvable:$true] %s41
      %47 = dma.hbm_to_vmem [thread:$0]  %s3, 4096, %s42, [#allocation5], 128, 128, 8
    $region17: #{actor_critic_forward.1} parent=1 // pred_fallthru
      _
    // Predicated region
    $region18: #{actor_critic_forward.1} parent=1 // pred_check
      _
    $region19: #{actor_critic_forward.1} parent=1 // pred_check_branch
      %49 = sbr.rel (0) target = $region21
    $region20: #{actor_critic_forward.1} parent=1 // pred_region
      _
    $region21: #{actor_critic_forward.1} parent=1 // pred_fallthru
      _
    // Predicated region
    $region22: #{actor_critic_forward.1} parent=1 // pred_check
      _
    $region23: #{actor_critic_forward.1} parent=1 // pred_check_branch
      %51 = sbr.rel (0) target = $region25
    $region24: #{actor_critic_forward.1} parent=1 // pred_region
      %52 = dma.done [#allocation3], 128
    $region25: #{actor_critic_forward.1} parent=1 // pred_fallthru
      _
    // Predicated region
    $region26: #{actor_critic_forward.1} parent=1 // pred_check
      _
    $region27: #{actor_critic_forward.1} parent=1 // pred_check_branch
      %54 = sbr.rel (0) target = $region29
    $region28: #{actor_critic_forward.1} parent=1 // pred_region
      %55 = dma.done [#allocation5], 1024
    $region29: #{actor_critic_forward.1} parent=1 // pred_fallthru
      _
    // Predicated region
    $region30: #{actor_critic_forward.1} parent=1 // pred_check
      _
    $region31: #{actor_critic_forward.1} parent=1 // pred_check_branch
      %57 = sbr.rel (0) target = $region33
    $region32: #{actor_critic_forward.1} parent=1 // pred_region
      %58 = dma.done [#allocation5], 4096
    $region33: #{actor_critic_forward.1} parent=1 // pred_fallthru
      _
    %v59 = vld [vmem:[#allocation2] sm:$0xff]
    %v60 = vld [vmem:[#allocation4] sm:$0xff]
    %v61 = vld [vmem:[#allocation4 + $0x8] sm:$0xff]
    %v62 = vld [vmem:[#allocation4 + $0x10] sm:$0xff]
    %v63 = vld [vmem:[#allocation4 + $0x18] sm:$0xff]
    %v64 = vld [vmem:[#allocation4 + $0x20] sm:$0xff]
    %v65 = vld [vmem:[#allocation4 + $0x28] sm:$0xff]
    %v66 = vld [vmem:[#allocation4 + $0x30] sm:$0xff]
    %v67 = vld [vmem:[#allocation4 + $0x38] sm:$0xff]
    %v68 = vld [vmem:[%s2] sm:$0x3]
    %v70 = vlaneseq
    %v71 = vshrl.u32 %v70, 7
    %v72 = vsub.s32 0, %v71
    %v73 = vrot.slane %v68, %v72
    %v74 = vlaneseq
    %v75 = vshrl.u32 %v74, 7
    %v76 = vsub.s32 1, %v75
    %v77 = vrot.slane %v68, %v76
    %vm80 = vcmask 261120
    %v82 = vsel %vm80, %v59, 0
    %84 = vmatprep.subr.mxu0 %v61
    %85 = vmatpush1.msra.mxu0 %v60
    %86 = vmatprep.subr.mxu0 %v63
    %87 = vmatpush1.msra.mxu0 %v62
    %88 = vmatprep.subr.mxu0 %v65
    %89 = vmatpush1.msra.mxu0 %v64
    %90 = vmatprep.subr.mxu0 %v67
    %91 = vmatpush1.msra.mxu0 %v66
    %92 = vmatprep.subr.mxu0 0.0
    %93 = vmatpush1.msra.mxu0 0.0
    %94 = vmatprep.subr.mxu0 0.0
    %95 = vmatpush1.msra.mxu0 0.0
    %96 = vmatprep.subr.mxu0 0.0
    %97 = vmatpush1.msra.mxu0 0.0
    %98 = vmatprep.subr.mxu0 0.0
    %99 = vmatpush1.msra.mxu0 0.0
    %100 = vmatprep.subr.mxu0 0.0
    %101 = vmatpush1.msra.mxu0 0.0
    %102 = vmatprep.subr.mxu0 0.0
    %103 = vmatpush1.msra.mxu0 0.0
    %104 = vmatprep.subr.mxu0 0.0
    %105 = vmatpush1.msra.mxu0 0.0
    %106 = vmatprep.subr.mxu0 0.0
    %107 = vmatpush1.msra.mxu0 0.0
    %108 = vmatprep.subr.mxu0 0.0
    %109 = vmatpush1.msra.mxu0 0.0
    %110 = vmatprep.subr.mxu0 0.0
    %111 = vmatpush1.msra.mxu0 0.0
    %112 = vmatprep.subr.mxu0 0.0
    %113 = vmatpush1.msra.mxu0 0.0
    %114 = vmatprep.subr.mxu0 0.0
    %115 = vmatpush1.msra.mxu0 0.0
    %116 = vmatprep.subr.mxu0 0.0
    %117 = vmatpush1.msra.mxu0 0.0
    %118 = vmatprep.subr.mxu0 0.0
    %119 = vmatpush1.msra.mxu0 0.0
    %120 = vmatprep.subr.mxu0 0.0
    %121 = vmatpush1.msra.mxu0 0.0
    %122 = vmatprep.subr.mxu0 0.0
    %123 = vmatpush1.msra.mxu0 0.0
    %124 = vmatprep.subr.mxu0 0.0
    %125 = vmatpush1.msra.mxu0 0.0
    %126 = vmatprep.subr.mxu0 0.0
    %127 = vmatpush1.msra.mxu0 0.0
    %128 = vmatprep.subr.mxu0 0.0
    %129 = vmatpush1.msra.mxu0 0.0
    %130 = vmatprep.subr.mxu0 0.0
    %131 = vmatpush1.msra.mxu0 0.0
    %132 = vmatprep.subr.mxu0 0.0
    %133 = vmatpush1.msra.mxu0 0.0
    %134 = vmatprep.subr.mxu0 0.0
    %135 = vmatpush1.msra.mxu0 0.0
    %136 = vmatprep.subr.mxu0 0.0
    %137 = vmatpush1.msra.mxu0 0.0
    %138 = vmatprep.subr.mxu0 0.0
    %139 = vmatpush1.msra.mxu0 0.0
    %140 = vmatprep.subr.mxu0 0.0
    %141 = vmatpush1.msra.mxu0 0.0
    %142 = vmatprep.subr.mxu0 0.0
    %143 = vmatpush1.msra.mxu0 0.0
    %144 = vmatprep.subr.mxu0 0.0
    %145 = vmatpush1.msra.mxu0 0.0
    %146 = vmatprep.subr.mxu0 0.0
    %147 = vmatpush1.msra.mxu0 0.0
    %148 = vmatprep.mubr.f32.mxu0 0.0
    %149 = vmatmul.mubr.f32.gmra.mrb[0].mxu0 %v82
    %v150 = vpop.f32.mrb[0].mxu0
    %v151 = vadd.f32 %v73, %v150
    %v152 = vpop.f32.mrb[0].mxu0
    %v153 = vadd.f32 %v77, %v152
    %154 = vdwg.mxu0
    %v155 = vmax.f32 %v151, 0.0
    %v156 = vmax.f32 %v153, 0.0
    %v157 = vld [vmem:[#allocation6] sm:$0xff]
    %v158 = vld [vmem:[#allocation6 + $0x8] sm:$0xff]
    %v159 = vld [vmem:[#allocation6 + $0x10] sm:$0xff]
    %v160 = vld [vmem:[#allocation6 + $0x18] sm:$0xff]
    %v161 = vld [vmem:[#allocation6 + $0x20] sm:$0xff]
    %v162 = vld [vmem:[#allocation6 + $0x28] sm:$0xff]
    %v163 = vld [vmem:[#allocation6 + $0x30] sm:$0xff]
    %v164 = vld [vmem:[#allocation6 + $0x38] sm:$0xff]
    %v165 = vld [vmem:[#allocation6 + $0x40] sm:$0xff]
    %v166 = vld [vmem:[#allocation6 + $0x48] sm:$0xff]
    %v167 = vld [vmem:[#allocation6 + $0x50] sm:$0xff]
    %v168 = vld [vmem:[#allocation6 + $0x58] sm:$0xff]
    %v169 = vld [vmem:[#allocation6 + $0x60] sm:$0xff]
    %v170 = vld [vmem:[#allocation6 + $0x68] sm:$0xff]
    %v171 = vld [vmem:[#allocation6 + $0x70] sm:$0xff]
    %v172 = vld [vmem:[#allocation6 + $0x78] sm:$0xff]
    %v173 = vld [vmem:[#allocation6 + $0x80] sm:$0xff]
    %v174 = vld [vmem:[#allocation6 + $0x88] sm:$0xff]
    %v175 = vld [vmem:[#allocation6 + $0x90] sm:$0xff]
    %v176 = vld [vmem:[#allocation6 + $0x98] sm:$0xff]
    %v177 = vld [vmem:[#allocation6 + $0xa0] sm:$0xff]
    %v178 = vld [vmem:[#allocation6 + $0xa8] sm:$0xff]
    %v179 = vld [vmem:[#allocation6 + $0xb0] sm:$0xff]
    %v180 = vld [vmem:[#allocation6 + $0xb8] sm:$0xff]
    %v181 = vld [vmem:[#allocation6 + $0xc0] sm:$0xff]
    %v182 = vld [vmem:[#allocation6 + $0xc8] sm:$0xff]
    %v183 = vld [vmem:[#allocation6 + $0xd0] sm:$0xff]
    %v184 = vld [vmem:[#allocation6 + $0xd8] sm:$0xff]
    %v185 = vld [vmem:[#allocation6 + $0xe0] sm:$0xff]
    %v186 = vld [vmem:[#allocation6 + $0xe8] sm:$0xff]
    %v187 = vld [vmem:[#allocation6 + $0xf0] sm:$0xff]
    %v188 = vld [vmem:[#allocation6 + $0xf8] sm:$0xff]
    %v189 = vld [vmem:[%s4] sm:$0x1]
    %v191 = vlaneseq
    %v192 = vshrl.u32 %v191, 7
    %v193 = vsub.s32 0, %v192
    %v194 = vrot.slane %v189, %v193
    %196 = vmatprep.subr.mxu0 0.0
    %197 = vmatpush1.msra.mxu0 %v157
    %198 = vmatprep.subr.mxu0 0.0
    %199 = vmatpush1.msra.mxu0 %v158
    %200 = vmatprep.subr.mxu0 0.0
    %201 = vmatpush1.msra.mxu0 %v159
    %202 = vmatprep.subr.mxu0 0.0
    %203 = vmatpush1.msra.mxu0 %v160
    %204 = vmatprep.subr.mxu0 0.0
    %205 = vmatpush1.msra.mxu0 %v161
    %206 = vmatprep.subr.mxu0 0.0
    %207 = vmatpush1.msra.mxu0 %v162
    %208 = vmatprep.subr.mxu0 0.0
    %209 = vmatpush1.msra.mxu0 %v163
    %210 = vmatprep.subr.mxu0 0.0
    %211 = vmatpush1.msra.mxu0 %v164
    %212 = vmatprep.subr.mxu0 0.0
    %213 = vmatpush1.msra.mxu0 %v165
    %214 = vmatprep.subr.mxu0 0.0
    %215 = vmatpush1.msra.mxu0 %v166
    %216 = vmatprep.subr.mxu0 0.0
    %217 = vmatpush1.msra.mxu0 %v167
    %218 = vmatprep.subr.mxu0 0.0
    %219 = vmatpush1.msra.mxu0 %v168
    %220 = vmatprep.subr.mxu0 0.0
    %221 = vmatpush1.msra.mxu0 %v169
    %222 = vmatprep.subr.mxu0 0.0
    %223 = vmatpush1.msra.mxu0 %v170
    %224 = vmatprep.subr.mxu0 0.0
    %225 = vmatpush1.msra.mxu0 %v171
    %226 = vmatprep.subr.mxu0 0.0
    %227 = vmatpush1.msra.mxu0 %v172
    %228 = vmatprep.subr.mxu0 0.0
    %229 = vmatpush1.msra.mxu0 %v173
    %230 = vmatprep.subr.mxu0 0.0
    %231 = vmatpush1.msra.mxu0 %v174
    %232 = vmatprep.subr.mxu0 0.0
    %233 = vmatpush1.msra.mxu0 %v175
    %234 = vmatprep.subr.mxu0 0.0
    %235 = vmatpush1.msra.mxu0 %v176
    %236 = vmatprep.subr.mxu0 0.0
    %237 = vmatpush1.msra.mxu0 %v177
    %238 = vmatprep.subr.mxu0 0.0
    %239 = vmatpush1.msra.mxu0 %v178
    %240 = vmatprep.subr.mxu0 0.0
    %241 = vmatpush1.msra.mxu0 %v179
    %242 = vmatprep.subr.mxu0 0.0
    %243 = vmatpush1.msra.mxu0 %v180
    %244 = vmatprep.subr.mxu0 0.0
    %245 = vmatpush1.msra.mxu0 %v181
    %246 = vmatprep.subr.mxu0 0.0
    %247 = vmatpush1.msra.mxu0 %v182
    %248 = vmatprep.subr.mxu0 0.0
    %249 = vmatpush1.msra.mxu0 %v183
    %250 = vmatprep.subr.mxu0 0.0
    %251 = vmatpush1.msra.mxu0 %v184
    %252 = vmatprep.subr.mxu0 0.0
    %253 = vmatpush1.msra.mxu0 %v185
    %254 = vmatprep.subr.mxu0 0.0
    %255 = vmatpush1.msra.mxu0 %v186
    %256 = vmatprep.subr.mxu0 0.0
    %257 = vmatpush1.msra.mxu0 %v187
    %258 = vmatprep.subr.mxu0 0.0
    %259 = vmatpush1.msra.mxu0 %v188
    %260 = vmatprep.mubr.f32.mxu0 %v156
    %261 = vmatmul.mubr.f32.gmra.mrb[0].mxu0 %v155
    %v262 = vpop.f32.mrb[0].mxu0
    %v263 = vadd.f32 %v194, %v262
    %v264 = vpop.f32.mrb[0].mxu0
    %265 = vdwg.mxu0
    %266 = vst [vmem:[%s5] sm:$0xff] %v263
    // Predicated region
    $region34: #{actor_critic_forward.1} parent=1 // pred_check
      _
    $region35: #{actor_critic_forward.1} parent=1 // pred_check_branch
      %268 = sbr.rel (0) target = $region37
    $region36: #{actor_critic_forward.1} parent=1 // pred_region
      _
    $region37: #{actor_critic_forward.1} parent=1 // pred_fallthru
      _
    // Predicated region
    $region38: #{actor_critic_forward.1} parent=1 // pred_check
      _
    $region39: #{actor_critic_forward.1} parent=1 // pred_check_branch
      %270 = sbr.rel (0) target = $region41
    $region40: #{actor_critic_forward.1} parent=1 // pred_region
      _
    $region41: #{actor_critic_forward.1} parent=1 // pred_fallthru
      _
    %271 = vsyncpa [#allocation3], 1
    %272 = vsyncpa [#allocation5], 1

</llo_original>
